<compile_context>
chip_gen: v6e
topology: v6e:2x2x1
jax: 0.10.0
libtpu: 0.0.40
codegen_flags: <defaults>
</compile_context>

<pallas_src>
import jax
import jax.numpy as jnp
from jax.experimental import pallas as pl
from jax.experimental.pallas import tpu as pltpu

HIDDEN = 32


def critic_kernel(state_t_ref, w1_ref, b1_ref, w3_ref, b3_ref, out_ref):
    # state_t: (state_dim, TB) -- batch on the 128-lane axis.
    # h = relu(W1 @ state^T + b1)  -> (32, TB), lane-dense in batch.
    h = jnp.dot(w1_ref[...], state_t_ref[...],
                preferred_element_type=jnp.float32) + b1_ref[...]
    h = jnp.maximum(h, 0.0)
    # linear3 (32 -> 1) as VPU mul + sublane reduction (XLU), not a 1-column
    # MXU matmul; result stays lane-dense: (1, TB).
    v = jnp.sum(h * w3_ref[...], axis=0, keepdims=True) + b3_ref[...]
    out_ref[...] = v.astype(out_ref.dtype)


def critic_forward(state, action, params, *, block_b=1024):
    """value[0] of the torch Critic: relu(state @ W1^T + b1) @ W3^T + b3.

    `action` and the linear2 parameters are accepted for API parity with the
    torch module but are never read: value[0] does not depend on the action
    path, so they are never DMA'd into the kernel.
    """
    del action
    w1, b1, w2, b2, w3, b3 = params          # torch layout: weight (out, in)
    del w2, b2                               # dead path
    B, state_dim = state.shape

    # Lane-dense batch layout: pad batch up to a multiple of the lane tile.
    tb = min(block_b, max(128, 128 * (-(-B // 128))))
    b_pad = tb * (-(-B // tb))

    state_t = jnp.zeros((state_dim, b_pad), jnp.float32)
    state_t = state_t.at[:, :B].set(state.T.astype(jnp.float32))

    w1_f = w1.astype(jnp.float32)                          # (32, state_dim)
    b1_col = b1.reshape(HIDDEN, 1).astype(jnp.float32)     # (32, 1)
    w3_col = w3.reshape(HIDDEN, 1).astype(jnp.float32)     # (32, 1) == w3.T
    b3_s = b3.reshape(1, 1).astype(jnp.float32)            # (1, 1)

    out = pl.pallas_call(
        critic_kernel,
        out_shape=jax.ShapeDtypeStruct((1, b_pad), jnp.float32),
        grid=(b_pad // tb,),
        in_specs=[
            pl.BlockSpec((state_dim, tb), lambda i: (0, i)),      # state^T tile
            pl.BlockSpec((HIDDEN, state_dim), lambda i: (0, 0)),  # W1 resident
            pl.BlockSpec((HIDDEN, 1), lambda i: (0, 0)),          # b1 resident
            pl.BlockSpec((HIDDEN, 1), lambda i: (0, 0)),          # W3 resident
            pl.BlockSpec((1, 1), lambda i: (0, 0)),               # b3 resident
        ],
        out_specs=pl.BlockSpec((1, tb), lambda i: (0, i)),
        compiler_params=pltpu.CompilerParams(
            dimension_semantics=("parallel",)),
    )(state_t, w1_f, b1_col, w3_col, b3_s)

    # Back to the module's (B, 1) output shape (layout plumbing only).
    return out[0, :B][:, None]


def init_params(key, state_dim, action_dim, hidden=HIDDEN):
    """Deterministic synthetic init mirroring the nn.Linear shapes (torch layout)."""
    k1, k2, k3, k4, k5, k6 = jax.random.split(key, 6)

    def torch_linear_init(kw, kb, fan_in, fan_out):
        bound = 1.0 / jnp.sqrt(fan_in)
        w = jax.random.uniform(kw, (fan_out, fan_in), jnp.float32, -bound, bound)
        b = jax.random.uniform(kb, (fan_out,), jnp.float32, -bound, bound)
        return w, b

    w1, b1 = torch_linear_init(k1, k2, state_dim, hidden)      # linear1
    w2, b2 = torch_linear_init(k3, k4, action_dim, hidden)     # linear2
    # linear3: weight.uniform_(-0.03, 0.03); bias keeps default torch init
    w3 = jax.random.uniform(k5, (1, hidden), jnp.float32, -0.03, 0.03)
    bound3 = 1.0 / jnp.sqrt(hidden)
    b3 = jax.random.uniform(k6, (1,), jnp.float32, -bound3, bound3)
    return (w1, b1, w2, b2, w3, b3)


def critic_reference(state, action, params):
    w1, b1, w2, b2, w3, b3 = params
    x = jnp.maximum(state @ w1.T + b1, 0.0)
    y = jnp.maximum(action @ w2.T + b2, 0.0)
    value = jnp.stack((x, y))            # (2, B, 32)
    value = value @ w3.T + b3            # (2, B, 1)
    return value[0]


if __name__ == "__main__":
    B, state_dim, action_dim = 8, 16, 4

    key = jax.random.PRNGKey(0)
    k_state, k_action, k_params = jax.random.split(key, 3)

    state = jax.random.normal(k_state, (B, state_dim), jnp.float32)
    action = jax.random.normal(k_action, (B, action_dim), jnp.float32)
    params = init_params(k_params, state_dim, action_dim)

    out = critic_forward(state, action, params)
    out = jax.block_until_ready(out)

    ref = critic_reference(state, action, params)
    assert out.shape == (B, 1), out.shape
    assert jnp.allclose(out, ref, atol=1e-5, rtol=1e-5), (out, ref)

    print("KERNEL_OK")
</pallas_src>

<mosaic_0001>
module attributes {stable_mosaic.version = 11 : i64} {
  func.func @critic_kernel(%arg0: i32, %arg1: memref<16x128xf32, #tpu.memory_space<vmem>>, %arg2: memref<32x16xf32, #tpu.memory_space<vmem>>, %arg3: memref<32x1xf32, #tpu.memory_space<vmem>>, %arg4: memref<32x1xf32, #tpu.memory_space<vmem>>, %arg5: memref<1x1xf32, #tpu.memory_space<vmem>>, %arg6: memref<1x128xf32, #tpu.memory_space<vmem>>) attributes {dimension_semantics = [#tpu.dimension_semantics<parallel>], iteration_bounds = array<i64: 1>, scalar_prefetch = 0 : i64, scratch_operands = 0 : i64, tpu.core_type = #tpu.core_type<tc>, window_params = [{transform_indices = @transform_0, window_bounds = array<i64: 16, 128>}, {pipeline_mode = #tpu.pipeline_mode<synchronous>, transform_indices = @transform_1, window_bounds = array<i64: 32, 16>}, {pipeline_mode = #tpu.pipeline_mode<synchronous>, transform_indices = @transform_2, window_bounds = array<i64: 32, 1>}, {pipeline_mode = #tpu.pipeline_mode<synchronous>, transform_indices = @transform_3, window_bounds = array<i64: 32, 1>}, {pipeline_mode = #tpu.pipeline_mode<synchronous>, transform_indices = @transform_4, window_bounds = array<i64: 1, 1>}, {transform_indices = @transform_5, window_bounds = array<i64: 1, 128>}]} {
    %c0 = arith.constant 0 : index
    %c0_0 = arith.constant 0 : index
    %0 = vector.load %arg2[%c0, %c0_0] : memref<32x16xf32, #tpu.memory_space<vmem>>, vector<32x16xf32>
    %c0_1 = arith.constant 0 : index
    %c0_2 = arith.constant 0 : index
    %1 = vector.load %arg1[%c0_1, %c0_2] : memref<16x128xf32, #tpu.memory_space<vmem>>, vector<16x128xf32>
    %cst = arith.constant dense<0.000000e+00> : vector<32x128xf32>
    %2 = tpu.matmul %0, %1, %cst {dimension_numbers = #tpu.dot_dimension_numbers<[1], [0], [0], [1], [0, 0, 1, 1], [], []>} : vector<32x16xf32>, vector<16x128xf32>, vector<32x128xf32> -> vector<32x128xf32>
    %c0_3 = arith.constant 0 : index
    %c0_4 = arith.constant 0 : index
    %3 = vector.load %arg3[%c0_3, %c0_4] : memref<32x1xf32, #tpu.memory_space<vmem>>, vector<32x1xf32>
    %4 = vector.broadcast %3 : vector<32x1xf32> to vector<32x128xf32>
    %5 = arith.addf %2, %4 : vector<32x128xf32>
    %cst_5 = arith.constant 0.000000e+00 : f32
    %6 = vector.broadcast %cst_5 : f32 to vector<32x128xf32>
    %7 = arith.maximumf %5, %6 : vector<32x128xf32>
    %c0_6 = arith.constant 0 : index
    %c0_7 = arith.constant 0 : index
    %8 = vector.load %arg4[%c0_6, %c0_7] : memref<32x1xf32, #tpu.memory_space<vmem>>, vector<32x1xf32>
    %9 = vector.broadcast %8 : vector<32x1xf32> to vector<32x128xf32>
    %10 = arith.mulf %7, %9 : vector<32x128xf32>
    %cst_8 = arith.constant dense<0.000000e+00> : vector<128xf32>
    %11 = vector.multi_reduction <add>, %10, %cst_8 [0] : vector<32x128xf32> to vector<128xf32>
    %12 = vector.shape_cast %11 : vector<128xf32> to vector<1x128xf32>
    %c0_9 = arith.constant 0 : index
    %c0_10 = arith.constant 0 : index
    %13 = vector.load %arg5[%c0_9, %c0_10] : memref<1x1xf32, #tpu.memory_space<vmem>>, vector<1x1xf32>
    %14 = vector.broadcast %13 : vector<1x1xf32> to vector<1x128xf32>
    %15 = arith.addf %12, %14 : vector<1x128xf32>
    %c0_11 = arith.constant 0 : index
    %c0_12 = arith.constant 0 : index
    %16 = vector.load %arg6[%c0_11, %c0_12] : memref<1x128xf32, #tpu.memory_space<vmem>>, vector<1x128xf32>
    tpu.vector_store %arg6[%c0_11, %c0_12], %15 {strides = array<i32>} : memref<1x128xf32, #tpu.memory_space<vmem>>, vector<1x128xf32>,
    return
  }
  func.func @transform_0(%arg0: i32) -> (i32, i32) {
    %c0_i32 = arith.constant 0 : i32
    %c0_i32_0 = arith.constant 0 : i32
    return %c0_i32, %arg0 : i32, i32
  }
  func.func @transform_1(%arg0: i32) -> (i32, i32) {
    %c0_i32 = arith.constant 0 : i32
    %c0_i32_0 = arith.constant 0 : i32
    %c0_i32_1 = arith.constant 0 : i32
    return %c0_i32, %c0_i32_0 : i32, i32
  }
  func.func @transform_2(%arg0: i32) -> (i32, i32) {
    %c0_i32 = arith.constant 0 : i32
    %c0_i32_0 = arith.constant 0 : i32
    %c0_i32_1 = arith.constant 0 : i32
    return %c0_i32, %c0_i32_0 : i32, i32
  }
  func.func @transform_3(%arg0: i32) -> (i32, i32) {
    %c0_i32 = arith.constant 0 : i32
    %c0_i32_0 = arith.constant 0 : i32
    %c0_i32_1 = arith.constant 0 : i32
    return %c0_i32, %c0_i32_0 : i32, i32
  }
  func.func @transform_4(%arg0: i32) -> (i32, i32) {
    %c0_i32 = arith.constant 0 : i32
    %c0_i32_0 = arith.constant 0 : i32
    %c0_i32_1 = arith.constant 0 : i32
    return %c0_i32, %c0_i32_0 : i32, i32
  }
  func.func @transform_5(%arg0: i32) -> (i32, i32) {
    %c0_i32 = arith.constant 0 : i32
    %c0_i32_0 = arith.constant 0 : i32
    return %c0_i32, %arg0 : i32, i32
  }
}

</mosaic_0001>

<llo_original>
// kernel: tpu_custom_call.1
$region0: #{tpu_custom_call.1}
  #allocation0 [shape = 'u32[]', space=smem, size = 0x4, offset = 0x4, fixed_abs, tag = 'smem constant byte address 0x4 - core index']
  #allocation1 [shape = 'u32[144,128]{1,0:T(1,128)}', space=vmem, size = 0x12000, scoped, tag = 'internal scratch']
  #allocation2 [shape = 'f32[1,1]{1,0:T(1,128)S(1)}', space=vmem, size = 0x200, scoped, tag = 'scoped memory for tpu_custom_call.1']
  %s0 = inlined_call_operand.vmem [shape: f32[16,128], index: 0, kind: input, shape index: {}]
  %s1 = inlined_call_operand.vmem [shape: f32[32,16], index: 1, kind: input, shape index: {}]
  %s2 = inlined_call_operand.vmem [shape: f32[32,1], index: 2, kind: input, shape index: {}]
  %s3 = inlined_call_operand.vmem [shape: f32[32,1], index: 3, kind: input, shape index: {}]
  %s4 = inlined_call_operand.<no memory space> [shape: f32[1,1], index: 4, kind: input, shape index: {}]
  %s5 = inlined_call_operand.hbm [shape: f32[1,128], index: 5, kind: output, shape index: {}]
  %s6 = sld [smem:[#allocation0]]
  $region30: #{tpu_custom_call.1} parent=0
    _
  %s8 = ssub.s32 1, %s6
  %s9 = scalar_select 0, %s8, %s6
  %v10 = vstv %s4
  %11 = vst [vmem:[#allocation2] sm:$0x1] %v10
  $region1: #{tpu_custom_call.1} parent=0
    #allocation3 [shape = 'u8[512]{0}', space=vmem, size = 0x400, scoped, tag = 'output window, operand 0, single buffered']
    #allocation4 [shape = 's32[1]{0}', space=sflag, size = 0x4, scoped, tag = 'scoped memory for tpu_custom_call.1']
    %12 = vsyncpa [#allocation4], 0
    // Predicated region
    $region2: #{tpu_custom_call.1} parent=1 // pred_check
      _
    $region3: #{tpu_custom_call.1} parent=1 // pred_check_branch
      %14 = sbr.rel (0) target = $region5
    $region4: #{tpu_custom_call.1} parent=1 // pred_region
      _
    $region5: #{tpu_custom_call.1} parent=1 // pred_fallthru
      _
    // Predicated region
    $region6: #{tpu_custom_call.1} parent=1 // pred_check
      _
    $region7: #{tpu_custom_call.1} parent=1 // pred_check_branch
      %16 = sbr.rel (0) target = $region9
    $region8: #{tpu_custom_call.1} parent=1 // pred_region
      _
    $region9: #{tpu_custom_call.1} parent=1 // pred_fallthru
      _
    // Predicated region
    $region10: #{tpu_custom_call.1} parent=1 // pred_check
      _
    $region11: #{tpu_custom_call.1} parent=1 // pred_check_branch
      %18 = sbr.rel (0) target = $region13
    $region12: #{tpu_custom_call.1} parent=1 // pred_region
      _
    $region13: #{tpu_custom_call.1} parent=1 // pred_fallthru
      _
    // Predicated region
    $region14: #{tpu_custom_call.1} parent=1 // pred_check
      _
    $region15: #{tpu_custom_call.1} parent=1 // pred_check_branch
      %20 = sbr.rel (0) target = $region17
    $region16: #{tpu_custom_call.1} parent=1 // pred_region
      _
    $region17: #{tpu_custom_call.1} parent=1 // pred_fallthru
      _
    // Predicated region
    $region18: #{tpu_custom_call.1} parent=1 // pred_check
      _
    $region19: #{tpu_custom_call.1} parent=1 // pred_check_branch
      %22 = sbr.rel (0) target = $region21
    $region20: #{tpu_custom_call.1} parent=1 // pred_region
      _
    $region21: #{tpu_custom_call.1} parent=1 // pred_fallthru
      _
    %v23 = vld [vmem:[%s1] sm:$0xff]
    %v24 = vld [vmem:[%s1 + $0x8] sm:$0xff]
    %v25 = vld [vmem:[%s1 + $0x10] sm:$0xff]
    %v26 = vld [vmem:[%s1 + $0x18] sm:$0xff]
    %v27 = vld [vmem:[%s0] sm:$0xff]
    %v28 = vld [vmem:[%s0 + $0x8] sm:$0xff]
    %v29 = vld [vmem:[%s2] sm:$0xff]
    %v30 = vld [vmem:[%s2 + $0x8] sm:$0xff]
    %v31 = vld [vmem:[%s2 + $0x10] sm:$0xff]
    %v32 = vld [vmem:[%s2 + $0x18] sm:$0xff]
    %34 = vset.pattern.permute.xlu0 0
    %35 = vperm.xlu0 %34, %v29
    %v36 = vpop.permute.xlu0 %35
    %39 = vset.pattern.permute.xlu0 0
    %40 = vperm.xlu0 %39, %v30
    %v41 = vpop.permute.xlu0 %40
    %44 = vset.pattern.permute.xlu0 0
    %45 = vperm.xlu0 %44, %v31
    %v46 = vpop.permute.xlu0 %45
    %49 = vset.pattern.permute.xlu0 0
    %50 = vperm.xlu0 %49, %v32
    %v51 = vpop.permute.xlu0 %50
    %vm53 = vcmask 130048
    %v55 = vsel %vm53, %v23, 0
    %v58 = vsel %vm53, %v24, 0
    %v61 = vsel %vm53, %v25, 0
    %v64 = vsel %vm53, %v26, 0
    %66 = vmatprep.subr.mxu0 0.0
    %67 = vmatpush1.msra.mxu0 0.0
    %68 = vmatprep.subr.mxu0 0.0
    %69 = vmatpush1.msra.mxu0 0.0
    %70 = vmatprep.subr.mxu0 0.0
    %71 = vmatpush1.msra.mxu0 0.0
    %72 = vmatprep.subr.mxu0 0.0
    %73 = vmatpush1.msra.mxu0 0.0
    %74 = vmatprep.subr.mxu0 0.0
    %75 = vmatpush1.msra.mxu0 0.0
    %76 = vmatprep.subr.mxu0 0.0
    %77 = vmatpush1.msra.mxu0 0.0
    %78 = vmatprep.subr.mxu0 0.0
    %79 = vmatpush1.msra.mxu0 0.0
    %80 = vmatprep.subr.mxu0 0.0
    %81 = vmatpush1.msra.mxu0 0.0
    %82 = vmatprep.subr.mxu0 0.0
    %83 = vmatpush1.msra.mxu0 0.0
    %84 = vmatprep.subr.mxu0 0.0
    %85 = vmatpush1.msra.mxu0 0.0
    %86 = vmatprep.subr.mxu0 0.0
    %87 = vmatpush1.msra.mxu0 0.0
    %88 = vmatprep.subr.mxu0 0.0
    %89 = vmatpush1.msra.mxu0 0.0
    %90 = vmatprep.subr.mxu0 0.0
    %91 = vmatpush1.msra.mxu0 0.0
    %92 = vmatprep.subr.mxu0 0.0
    %93 = vmatpush1.msra.mxu0 0.0
    %94 = vmatprep.subr.mxu0 0.0
    %95 = vmatpush1.msra.mxu0 %v28
    %96 = vmatprep.subr.mxu0 0.0
    %97 = vmatpush1.msra.mxu0 %v27
    %98 = vmatprep.subr.mxu0 0.0
    %99 = vmatpush2.msra.mxu0 0.0
    %100 = vmatprep.subr.mxu0 0.0
    %101 = vmatpush2.msra.mxu0 0.0
    %102 = vmatprep.subr.mxu0 0.0
    %103 = vmatpush2.msra.mxu0 0.0
    %104 = vmatprep.subr.mxu0 0.0
    %105 = vmatpush2.msra.mxu0 0.0
    %106 = vmatprep.subr.mxu0 0.0
    %107 = vmatpush2.msra.mxu0 0.0
    %108 = vmatprep.subr.mxu0 0.0
    %109 = vmatpush2.msra.mxu0 0.0
    %110 = vmatprep.subr.mxu0 0.0
    %111 = vmatpush2.msra.mxu0 0.0
    %112 = vmatprep.subr.mxu0 0.0
    %113 = vmatpush2.msra.mxu0 0.0
    %114 = vmatprep.subr.mxu0 0.0
    %115 = vmatpush2.msra.mxu0 0.0
    %116 = vmatprep.subr.mxu0 0.0
    %117 = vmatpush2.msra.mxu0 0.0
    %118 = vmatprep.subr.mxu0 0.0
    %119 = vmatpush2.msra.mxu0 0.0
    %120 = vmatprep.subr.mxu0 0.0
    %121 = vmatpush2.msra.mxu0 0.0
    %122 = vmatprep.subr.mxu0 0.0
    %123 = vmatpush2.msra.mxu0 0.0
    %124 = vmatprep.subr.mxu0 0.0
    %125 = vmatpush2.msra.mxu0 0.0
    %126 = vmatprep.subr.mxu0 0.0
    %127 = vmatpush2.msra.mxu0 0.0
    %128 = vmatprep.subr.mxu0 0.0
    %129 = vmatpush2.msra.mxu0 0.0
    %130 = vmatprep.mubr.f32.mxu0 0.0
    %131 = vmatmul.mubr.f32.gmra.mxu0 %v55
    %v132 = vpop.f32.mrf.mxu0
    %v133 = vadd.f32 %v36, %v132
    %v134 = vpop.f32.mrf.mxu0
    %135 = vmatprep.mubr.f32.mxu0 0.0
    %136 = vmatmul.mubr.f32.gmra.mxu0 %v58
    %v137 = vpop.f32.mrf.mxu0
    %v138 = vadd.f32 %v41, %v137
    %v139 = vpop.f32.mrf.mxu0
    %140 = vmatprep.mubr.f32.mxu0 0.0
    %141 = vmatmul.mubr.f32.gmra.mxu0 %v61
    %v142 = vpop.f32.mrf.mxu0
    %v143 = vadd.f32 %v46, %v142
    %v144 = vpop.f32.mrf.mxu0
    %145 = vmatprep.mubr.f32.mxu0 0.0
    %146 = vmatmul.mubr.f32.gmra.mxu0 %v64
    %v147 = vpop.f32.mrf.mxu0
    %v148 = vadd.f32 %v51, %v147
    %v149 = vpop.f32.mrf.mxu0
    %150 = vdwg.mxu0
    %v151 = vmax.f32 %v133, 0.0
    %v152 = vmax.f32 %v138, 0.0
    %v153 = vmax.f32 %v143, 0.0
    %v154 = vmax.f32 %v148, 0.0
    %v155 = vld [vmem:[%s3] sm:$0xff]
    %v156 = vld [vmem:[%s3 + $0x8] sm:$0xff]
    %v157 = vld [vmem:[%s3 + $0x10] sm:$0xff]
    %v158 = vld [vmem:[%s3 + $0x18] sm:$0xff]
    %160 = vset.pattern.permute.xlu0 0
    %161 = vperm.xlu0 %160, %v155
    %v162 = vpop.permute.xlu0 %161
    %165 = vset.pattern.permute.xlu0 0
    %166 = vperm.xlu0 %165, %v156
    %v167 = vpop.permute.xlu0 %166
    %170 = vset.pattern.permute.xlu0 0
    %171 = vperm.xlu0 %170, %v157
    %v172 = vpop.permute.xlu0 %171
    %175 = vset.pattern.permute.xlu0 0
    %176 = vperm.xlu0 %175, %v158
    %v177 = vpop.permute.xlu0 %176
    %v179 = vmul.f32 %v151, %v162
    %v180 = vmul.f32 %v152, %v167
    %v181 = vmul.f32 %v153, %v172
    %v182 = vmul.f32 %v154, %v177
    %v183 = vadd.f32 %v179, %v180
    %v184 = vadd.f32 %v183, %v181
    %v185 = vadd.f32 %v184, %v182
    %v186 = vrot.slane %v185, 4
    %v187 = vadd.f32 %v185, %v186
    %v188 = vrot.slane %v187, 2
    %v189 = vadd.f32 %v187, %v188
    %v190 = vrot.slane %v189, 1
    %v191 = vadd.f32 %v189, %v190
    %v192 = vld [vmem:[#allocation2] sm:$0x1]
    %194 = vset.pattern.permute.xlu0 0
    %195 = vperm.xlu0 %194, %v192
    %v196 = vpop.permute.xlu0 %195
    %v198 = vlaneseq
    %v199 = vshrl.u32 %v198, 7
    %v200 = vsub.s32 0, %v199
    %v201 = vrot.slane %v196, %v200
    %v202 = vadd.f32 %v191, %v201
    %203 = vst [vmem:[#allocation3] sm:$0x1] %v202
    // Predicated region
    $region22: #{tpu_custom_call.1} parent=1 // pred_check
      _
    $region23: #{tpu_custom_call.1} parent=1 // pred_check_branch
      %205 = sbr.rel (0) target = $region25
    $region24: #{tpu_custom_call.1} parent=1 // pred_region
      %s207 = ssub.s32 16, 16
      %208 = vsyncadd [#allocation4], %s207
      %s210 = sshll.u32 [#allocation3], 4
      %s211 = int_to_ptr.vmem [resolvable:$true] %s210
      %213 = dma.vmem_to_hbm [thread:$0]  %s211, 16, %s5, [#allocation4]
    $region25: #{tpu_custom_call.1} parent=1 // pred_fallthru
      _
    // Predicated region
    $region26: #{tpu_custom_call.1} parent=1 // pred_check
      _
    $region27: #{tpu_custom_call.1} parent=1 // pred_check_branch
      %215 = sbr.rel (0) target = $region29
    $region28: #{tpu_custom_call.1} parent=1 // pred_region
      %216 = dma.done [#allocation4], 16
    $region29: #{tpu_custom_call.1} parent=1 // pred_fallthru
      _
    %217 = vsyncpa [#allocation4], 1

</llo_original>
